<compile_context>
chip_gen: v6e
topology: v6e:2x2x1
jax: 0.10.0
libtpu: 0.0.40
codegen_flags: <defaults>
</compile_context>

<pallas_src>
import functools

import jax
import jax.numpy as jnp
from jax.experimental import pallas as pl
from jax.experimental.pallas import tpu as pltpu


def _round_up(n: int, m: int) -> int:
    return ((n + m - 1) // m) * m


# ---------------------------------------------------------------------------
# Fused MLP kernel: refs = (x, w0, b0, w1, b1, ..., w_{L-1}, b_{L-1}, out)
# Weights are [in, out] (transposed vs. nn.Linear) so y = x @ W + b directly.
# Matmul inputs use the weight dtype (bf16 fast path), accumulation is f32,
# bias add + ReLU are f32 (v5e has no bf16 VPU), final store in out dtype.
# ---------------------------------------------------------------------------
def _fused_mlp_kernel(*refs, n_layers: int):
    x_ref = refs[0]
    o_ref = refs[1 + 2 * n_layers]
    h = x_ref[...].astype(jnp.float32)
    for i in range(n_layers):
        w_ref = refs[1 + 2 * i]          # [Din, Dout]
        b_ref = refs[2 + 2 * i]          # [1, Dout] (broadcast over rows)
        h = jnp.dot(h.astype(w_ref.dtype), w_ref[...],
                    preferred_element_type=jnp.float32)
        h = h + b_ref[...].astype(jnp.float32)
        if i < n_layers - 1:             # hidden layers: ReLU; final layer: linear
            h = jnp.maximum(h, 0.0)
    o_ref[...] = h.astype(o_ref.dtype)


# ---------------------------------------------------------------------------
# Parameter init (matches torch.nn.Linear default uniform(-1/sqrt(fan_in), .)).
# Weights stored [in, out] in weight_dtype (default bf16), biases [1, out] f32.
# ---------------------------------------------------------------------------
def init_params(key, in_d, h_shape, out_d, *, weight_dtype=jnp.bfloat16):
    dims = [in_d] + list(h_shape) + [out_d]
    params = []
    for i in range(len(dims) - 1):
        fan_in, fan_out = dims[i], dims[i + 1]
        key, kw, kb = jax.random.split(key, 3)
        bound = 1.0 / (fan_in ** 0.5)
        w = jax.random.uniform(kw, (fan_in, fan_out), jnp.float32, -bound, bound)
        b = jax.random.uniform(kb, (1, fan_out), jnp.float32, -bound, bound)
        params.append((w.astype(weight_dtype), b))
    return params


# ---------------------------------------------------------------------------
# Fused forward pass: a single pallas_call, weights resident across the grid.
# ---------------------------------------------------------------------------
@functools.partial(jax.jit, static_argnames=("tile_batch", "single_buffer_weights"))
def state_action_agent_forward(x, params, *, tile_batch: int = 256,
                               single_buffer_weights: bool = True):
    n_layers = len(params)
    batch, in_d = x.shape
    assert params[0][0].shape[0] == in_d
    out_d = params[-1][0].shape[1]

    # --- batch tile selection -------------------------------------------------
    # Large batch: big tiles (>=256) to amortize the ~0.35us/step overhead and
    # fill the 256-wide MXU.  Mid-size batch: split into >=2 tiles so the
    # "parallel" axis can shard across both v7x TensorCores.  Tiny batch: 1 tile.
    if batch > tile_batch:
        tb = tile_batch
    elif batch >= 64:
        tb = _round_up(-(-batch // 2), 8)
    else:
        tb = _round_up(max(batch, 1), 8)
    grid = (pl.cdiv(batch, tb),)

    # --- VMEM budget ------------------------------------------------------------
    nbytes = lambda a: a.size * a.dtype.itemsize
    weight_bufs = 1 if single_buffer_weights else 2
    resident_bytes = weight_bufs * sum(nbytes(w) + nbytes(b) for (w, b) in params)
    if resident_bytes > (32 << 20):
        # TODO(synk): per-layer K/N tiling (pltpu.emit_pipeline) fallback for weight
        # sets that exceed the resident budget (v7x only has 64 MiB VMEM per TC).
        raise NotImplementedError(
            "resident weight set too large for the all-resident-weights design")
    max_feat = max([in_d, out_d] + [w.shape[1] for (w, _) in params])
    stream_bytes = 2 * (tb * in_d + tb * out_d) * x.dtype.itemsize  # double-buffered x/out tiles
    act_bytes = 2 * tb * max_feat * 4                               # f32 intermediates
    vmem_limit = int(min(96 << 20,
                         max(8 << 20, 2 * (resident_bytes + stream_bytes + act_bytes))))

    # --- BlockSpecs (no HBM-side padding; full-extent blocks for W/b) ------------
    resident_mode = pl.Buffered(1) if single_buffer_weights else None
    in_specs = [pl.BlockSpec((tb, in_d), lambda i: (i, 0))]
    for (w, b) in params:
        din, dout = w.shape
        if resident_mode is not None:
            in_specs.append(pl.BlockSpec((din, dout), lambda i: (0, 0),
                                         pipeline_mode=resident_mode))
            in_specs.append(pl.BlockSpec((1, dout), lambda i: (0, 0),
                                         pipeline_mode=resident_mode))
        else:
            in_specs.append(pl.BlockSpec((din, dout), lambda i: (0, 0)))
            in_specs.append(pl.BlockSpec((1, dout), lambda i: (0, 0)))
    out_specs = pl.BlockSpec((tb, out_d), lambda i: (i, 0))

    flops = sum(2 * batch * w.shape[0] * w.shape[1] for (w, _) in params)
    bytes_accessed = (nbytes(x) + batch * out_d * x.dtype.itemsize
                      + sum(nbytes(w) + nbytes(b) for (w, b) in params))

    flat_wb = [a for pair in params for a in pair]
    kernel = functools.partial(_fused_mlp_kernel, n_layers=n_layers)

    return pl.pallas_call(
        kernel,
        out_shape=jax.ShapeDtypeStruct((batch, out_d), x.dtype),
        grid=grid,
        in_specs=in_specs,
        out_specs=out_specs,
        compiler_params=pltpu.CompilerParams(
            dimension_semantics=("parallel",),
            vmem_limit_bytes=vmem_limit,
        ),
        cost_estimate=pl.CostEstimate(
            flops=flops, transcendentals=0, bytes_accessed=bytes_accessed),
    )(x, *flat_wb)


def run_forward(x, params):
    """Prefer single-buffered resident weights; fall back if unsupported."""
    try:
        return state_action_agent_forward(x, params, single_buffer_weights=True)
    except Exception:
        return state_action_agent_forward(x, params, single_buffer_weights=False)


# ---------------------------------------------------------------------------
# Pure-JAX reference (f32 math; weights upcast from their storage dtype).
# ---------------------------------------------------------------------------
def reference_forward(params, x):
    h = x.astype(jnp.float32)
    n_layers = len(params)
    for i, (w, b) in enumerate(params):
        h = h @ w.astype(jnp.float32) + b.astype(jnp.float32)
        if i < n_layers - 1:
            h = jnp.maximum(h, 0.0)
    return h


if __name__ == "__main__":
    key = jax.random.PRNGKey(0)
    key_x, key_p = jax.random.split(key)

    # Small shapes consistent with the module: in_d=32, h_shape=[64, 64], out_d=8
    batch, in_d, out_d = 8, 32, 8
    h_shape = [64, 64]

    x = jax.random.normal(key_x, (batch, in_d), dtype=jnp.float32)

    # Fast path: bf16 weights, f32 accumulation (bf16 tolerance).
    params_bf16 = init_params(key_p, in_d, h_shape, out_d, weight_dtype=jnp.bfloat16)
    out = jax.block_until_ready(run_forward(x, params_bf16))
    ref = reference_forward(params_bf16, x)
    assert out.shape == (batch, out_d)
    assert jnp.allclose(out, ref, atol=5e-2, rtol=5e-2), "bf16 path mismatch vs reference"

    # f32 weights path: tight-tolerance sanity check of the same kernel.
    params_f32 = init_params(key_p, in_d, h_shape, out_d, weight_dtype=jnp.float32)
    out32 = jax.block_until_ready(run_forward(x, params_f32))
    ref32 = reference_forward(params_f32, x)
    assert jnp.allclose(out32, ref32, atol=1e-5, rtol=1e-5), "f32 path mismatch vs reference"

    print("KERNEL_OK")
</pallas_src>

<mosaic_0001>
module attributes {stable_mosaic.version = 11 : i64} {
  func.func @_fused_mlp_kernel(%arg0: i32, %arg1: memref<8x32xf32, #tpu.memory_space<vmem>>, %arg2: memref<32x64xbf16, #tpu.memory_space<vmem>>, %arg3: memref<1x64xf32, #tpu.memory_space<vmem>>, %arg4: memref<64x64xbf16, #tpu.memory_space<vmem>>, %arg5: memref<1x64xf32, #tpu.memory_space<vmem>>, %arg6: memref<64x8xbf16, #tpu.memory_space<vmem>>, %arg7: memref<1x8xf32, #tpu.memory_space<vmem>>, %arg8: memref<8x8xf32, #tpu.memory_space<vmem>>) attributes {dimension_semantics = [#tpu.dimension_semantics<parallel>], iteration_bounds = array<i64: 1>, scalar_prefetch = 0 : i64, scratch_operands = 0 : i64, tpu.core_type = #tpu.core_type<tc>, window_params = [{transform_indices = @transform_0, window_bounds = array<i64: 8, 32>}, {pipeline_mode = #tpu.pipeline_mode<synchronous>, transform_indices = @transform_1, window_bounds = array<i64: 32, 64>}, {pipeline_mode = #tpu.pipeline_mode<synchronous>, transform_indices = @transform_2, window_bounds = array<i64: 1, 64>}, {pipeline_mode = #tpu.pipeline_mode<synchronous>, transform_indices = @transform_3, window_bounds = array<i64: 64, 64>}, {pipeline_mode = #tpu.pipeline_mode<synchronous>, transform_indices = @transform_4, window_bounds = array<i64: 1, 64>}, {pipeline_mode = #tpu.pipeline_mode<synchronous>, transform_indices = @transform_5, window_bounds = array<i64: 64, 8>}, {pipeline_mode = #tpu.pipeline_mode<synchronous>, transform_indices = @transform_6, window_bounds = array<i64: 1, 8>}, {transform_indices = @transform_7, window_bounds = array<i64: 8, 8>}]} {
    %c0 = arith.constant 0 : index
    %c0_0 = arith.constant 0 : index
    %0 = vector.load %arg1[%c0, %c0_0] : memref<8x32xf32, #tpu.memory_space<vmem>>, vector<8x32xf32>
    %1 = arith.truncf %0 : vector<8x32xf32> to vector<8x32xbf16>
    %c0_1 = arith.constant 0 : index
    %c0_2 = arith.constant 0 : index
    %2 = vector.load %arg2[%c0_1, %c0_2] : memref<32x64xbf16, #tpu.memory_space<vmem>>, vector<32x64xbf16>
    %cst = arith.constant dense<0.000000e+00> : vector<8x64xf32>
    %3 = tpu.matmul %1, %2, %cst {dimension_numbers = #tpu.dot_dimension_numbers<[1], [0], [0], [1], [0, 0, 1, 1], [], []>} : vector<8x32xbf16>, vector<32x64xbf16>, vector<8x64xf32> -> vector<8x64xf32>
    %c0_3 = arith.constant 0 : index
    %c0_4 = arith.constant 0 : index
    %4 = vector.load %arg3[%c0_3, %c0_4] : memref<1x64xf32, #tpu.memory_space<vmem>>, vector<1x64xf32>
    %5 = vector.broadcast %4 : vector<1x64xf32> to vector<8x64xf32>
    %6 = arith.addf %3, %5 : vector<8x64xf32>
    %cst_5 = arith.constant 0.000000e+00 : f32
    %7 = vector.broadcast %cst_5 : f32 to vector<8x64xf32>
    %8 = arith.maximumf %6, %7 : vector<8x64xf32>
    %9 = arith.truncf %8 : vector<8x64xf32> to vector<8x64xbf16>
    %c0_6 = arith.constant 0 : index
    %c0_7 = arith.constant 0 : index
    %10 = vector.load %arg4[%c0_6, %c0_7] : memref<64x64xbf16, #tpu.memory_space<vmem>>, vector<64x64xbf16>
    %cst_8 = arith.constant dense<0.000000e+00> : vector<8x64xf32>
    %11 = tpu.matmul %9, %10, %cst_8 {dimension_numbers = #tpu.dot_dimension_numbers<[1], [0], [0], [1], [0, 0, 1, 1], [], []>} : vector<8x64xbf16>, vector<64x64xbf16>, vector<8x64xf32> -> vector<8x64xf32>
    %c0_9 = arith.constant 0 : index
    %c0_10 = arith.constant 0 : index
    %12 = vector.load %arg5[%c0_9, %c0_10] : memref<1x64xf32, #tpu.memory_space<vmem>>, vector<1x64xf32>
    %13 = vector.broadcast %12 : vector<1x64xf32> to vector<8x64xf32>
    %14 = arith.addf %11, %13 : vector<8x64xf32>
    %cst_11 = arith.constant 0.000000e+00 : f32
    %15 = vector.broadcast %cst_11 : f32 to vector<8x64xf32>
    %16 = arith.maximumf %14, %15 : vector<8x64xf32>
    %17 = arith.truncf %16 : vector<8x64xf32> to vector<8x64xbf16>
    %c0_12 = arith.constant 0 : index
    %c0_13 = arith.constant 0 : index
    %18 = vector.load %arg6[%c0_12, %c0_13] : memref<64x8xbf16, #tpu.memory_space<vmem>>, vector<64x8xbf16>
    %cst_14 = arith.constant dense<0.000000e+00> : vector<8x8xf32>
    %19 = tpu.matmul %17, %18, %cst_14 {dimension_numbers = #tpu.dot_dimension_numbers<[1], [0], [0], [1], [0, 0, 1, 1], [], []>} : vector<8x64xbf16>, vector<64x8xbf16>, vector<8x8xf32> -> vector<8x8xf32>
    %c0_15 = arith.constant 0 : index
    %c0_16 = arith.constant 0 : index
    %20 = vector.load %arg7[%c0_15, %c0_16] : memref<1x8xf32, #tpu.memory_space<vmem>>, vector<1x8xf32>
    %21 = vector.broadcast %20 : vector<1x8xf32> to vector<8x8xf32>
    %22 = arith.addf %19, %21 : vector<8x8xf32>
    %c0_17 = arith.constant 0 : index
    %c0_18 = arith.constant 0 : index
    %23 = vector.load %arg8[%c0_17, %c0_18] : memref<8x8xf32, #tpu.memory_space<vmem>>, vector<8x8xf32>
    tpu.vector_store %arg8[%c0_17, %c0_18], %22 {strides = array<i32>} : memref<8x8xf32, #tpu.memory_space<vmem>>, vector<8x8xf32>,
    return
  }
  func.func @transform_0(%arg0: i32) -> (i32, i32) {
    %c0_i32 = arith.constant 0 : i32
    %c0_i32_0 = arith.constant 0 : i32
    return %arg0, %c0_i32 : i32, i32
  }
  func.func @transform_1(%arg0: i32) -> (i32, i32) {
    %c0_i32 = arith.constant 0 : i32
    %c0_i32_0 = arith.constant 0 : i32
    %c0_i32_1 = arith.constant 0 : i32
    return %c0_i32, %c0_i32_0 : i32, i32
  }
  func.func @transform_2(%arg0: i32) -> (i32, i32) {
    %c0_i32 = arith.constant 0 : i32
    %c0_i32_0 = arith.constant 0 : i32
    %c0_i32_1 = arith.constant 0 : i32
    return %c0_i32, %c0_i32_0 : i32, i32
  }
  func.func @transform_3(%arg0: i32) -> (i32, i32) {
    %c0_i32 = arith.constant 0 : i32
    %c0_i32_0 = arith.constant 0 : i32
    %c0_i32_1 = arith.constant 0 : i32
    return %c0_i32, %c0_i32_0 : i32, i32
  }
  func.func @transform_4(%arg0: i32) -> (i32, i32) {
    %c0_i32 = arith.constant 0 : i32
    %c0_i32_0 = arith.constant 0 : i32
    %c0_i32_1 = arith.constant 0 : i32
    return %c0_i32, %c0_i32_0 : i32, i32
  }
  func.func @transform_5(%arg0: i32) -> (i32, i32) {
    %c0_i32 = arith.constant 0 : i32
    %c0_i32_0 = arith.constant 0 : i32
    %c0_i32_1 = arith.constant 0 : i32
    return %c0_i32, %c0_i32_0 : i32, i32
  }
  func.func @transform_6(%arg0: i32) -> (i32, i32) {
    %c0_i32 = arith.constant 0 : i32
    %c0_i32_0 = arith.constant 0 : i32
    %c0_i32_1 = arith.constant 0 : i32
    return %c0_i32, %c0_i32_0 : i32, i32
  }
  func.func @transform_7(%arg0: i32) -> (i32, i32) {
    %c0_i32 = arith.constant 0 : i32
    %c0_i32_0 = arith.constant 0 : i32
    return %arg0, %c0_i32 : i32, i32
  }
}

module attributes {stable_mosaic.version = 11 : i64} {
  func.func @_fused_mlp_kernel(%arg0: i32, %arg1: memref<8x32xf32, #tpu.memory_space<vmem>>, %arg2: memref<32x64xbf16, #tpu.memory_space<vmem>>, %arg3: memref<1x64xf32, #tpu.memory_space<vmem>>, %arg4: memref<64x64xbf16, #tpu.memory_space<vmem>>, %arg5: memref<1x64xf32, #tpu.memory_space<vmem>>, %arg6: memref<64x8xbf16, #tpu.memory_space<vmem>>, %arg7: memref<1x8xf32, #tpu.memory_space<vmem>>, %arg8: memref<8x8xf32, #tpu.memory_space<vmem>>) attributes {dimension_semantics = [#tpu.dimension_semantics<parallel>], iteration_bounds = array<i64: 1>, scalar_prefetch = 0 : i64, scratch_operands = 0 : i64, tpu.core_type = #tpu.core_type<tc>, window_params = [{transform_indices = @transform_0, window_bounds = array<i64: 8, 32>}, {pipeline_mode = #tpu.pipeline_mode<synchronous>, transform_indices = @transform_1, window_bounds = array<i64: 32, 64>}, {pipeline_mode = #tpu.pipeline_mode<synchronous>, transform_indices = @transform_2, window_bounds = array<i64: 1, 64>}, {pipeline_mode = #tpu.pipeline_mode<synchronous>, transform_indices = @transform_3, window_bounds = array<i64: 64, 64>}, {pipeline_mode = #tpu.pipeline_mode<synchronous>, transform_indices = @transform_4, window_bounds = array<i64: 1, 64>}, {pipeline_mode = #tpu.pipeline_mode<synchronous>, transform_indices = @transform_5, window_bounds = array<i64: 64, 8>}, {pipeline_mode = #tpu.pipeline_mode<synchronous>, transform_indices = @transform_6, window_bounds = array<i64: 1, 8>}, {transform_indices = @transform_7, window_bounds = array<i64: 8, 8>}]} {
    %c0 = arith.constant 0 : index
    %c0_0 = arith.constant 0 : index
    %0 = vector.load %arg1[%c0, %c0_0] : memref<8x32xf32, #tpu.memory_space<vmem>>, vector<8x32xf32>
    %1 = arith.truncf %0 : vector<8x32xf32> to vector<8x32xbf16>
    %c0_1 = arith.constant 0 : index
    %c0_2 = arith.constant 0 : index
    %2 = vector.load %arg2[%c0_1, %c0_2] : memref<32x64xbf16, #tpu.memory_space<vmem>>, vector<32x64xbf16>
    %cst = arith.constant dense<0.000000e+00> : vector<8x64xf32>
    %3 = tpu.matmul %1, %2, %cst {dimension_numbers = #tpu.dot_dimension_numbers<[1], [0], [0], [1], [0, 0, 1, 1], [], []>} : vector<8x32xbf16>, vector<32x64xbf16>, vector<8x64xf32> -> vector<8x64xf32>
    %c0_3 = arith.constant 0 : index
    %c0_4 = arith.constant 0 : index
    %4 = vector.load %arg3[%c0_3, %c0_4] : memref<1x64xf32, #tpu.memory_space<vmem>>, vector<1x64xf32>
    %5 = vector.broadcast %4 : vector<1x64xf32> to vector<8x64xf32>
    %6 = arith.addf %3, %5 : vector<8x64xf32>
    %cst_5 = arith.constant 0.000000e+00 : f32
    %7 = vector.broadcast %cst_5 : f32 to vector<8x64xf32>
    %8 = arith.maximumf %6, %7 : vector<8x64xf32>
    %9 = arith.truncf %8 : vector<8x64xf32> to vector<8x64xbf16>
    %c0_6 = arith.constant 0 : index
    %c0_7 = arith.constant 0 : index
    %10 = vector.load %arg4[%c0_6, %c0_7] : memref<64x64xbf16, #tpu.memory_space<vmem>>, vector<64x64xbf16>
    %cst_8 = arith.constant dense<0.000000e+00> : vector<8x64xf32>
    %11 = tpu.matmul %9, %10, %cst_8 {dimension_numbers = #tpu.dot_dimension_numbers<[1], [0], [0], [1], [0, 0, 1, 1], [], []>} : vector<8x64xbf16>, vector<64x64xbf16>, vector<8x64xf32> -> vector<8x64xf32>
    %c0_9 = arith.constant 0 : index
    %c0_10 = arith.constant 0 : index
    %12 = vector.load %arg5[%c0_9, %c0_10] : memref<1x64xf32, #tpu.memory_space<vmem>>, vector<1x64xf32>
    %13 = vector.broadcast %12 : vector<1x64xf32> to vector<8x64xf32>
    %14 = arith.addf %11, %13 : vector<8x64xf32>
    %cst_11 = arith.constant 0.000000e+00 : f32
    %15 = vector.broadcast %cst_11 : f32 to vector<8x64xf32>
    %16 = arith.maximumf %14, %15 : vector<8x64xf32>
    %17 = arith.truncf %16 : vector<8x64xf32> to vector<8x64xbf16>
    %c0_12 = arith.constant 0 : index
    %c0_13 = arith.constant 0 : index
    %18 = vector.load %arg6[%c0_12, %c0_13] : memref<64x8xbf16, #tpu.memory_space<vmem>>, vector<64x8xbf16>
    %cst_14 = arith.constant dense<0.000000e+00> : vector<8x8xf32>
    %19 = tpu.matmul %17, %18, %cst_14 {dimension_numbers = #tpu.dot_dimension_numbers<[1], [0], [0], [1], [0, 0, 1, 1], [], []>} : vector<8x64xbf16>, vector<64x8xbf16>, vector<8x8xf32> -> vector<8x8xf32>
    %c0_15 = arith.constant 0 : index
    %c0_16 = arith.constant 0 : index
    %20 = vector.load %arg7[%c0_15, %c0_16] : memref<1x8xf32, #tpu.memory_space<vmem>>, vector<1x8xf32>
    %21 = vector.broadcast %20 : vector<1x8xf32> to vector<8x8xf32>
    %22 = arith.addf %19, %21 : vector<8x8xf32>
    %c0_17 = arith.constant 0 : index
    %c0_18 = arith.constant 0 : index
    %23 = vector.load %arg8[%c0_17, %c0_18] : memref<8x8xf32, #tpu.memory_space<vmem>>, vector<8x8xf32>
    tpu.vector_store %arg8[%c0_17, %c0_18], %22 {strides = array<i32>} : memref<8x8xf32, #tpu.memory_space<vmem>>, vector<8x8xf32>,
    return
  }
  func.func @transform_0(%arg0: i32) -> (i32, i32) {
    %c0_i32 = arith.constant 0 : i32
    %c0_i32_0 = arith.constant 0 : i32
    return %arg0, %c0_i32 : i32, i32
  }
  func.func @transform_1(%arg0: i32) -> (i32, i32) {
    %c0_i32 = arith.constant 0 : i32
    %c0_i32_0 = arith.constant 0 : i32
    %c0_i32_1 = arith.constant 0 : i32
    return %c0_i32, %c0_i32_0 : i32, i32
  }
  func.func @transform_2(%arg0: i32) -> (i32, i32) {
    %c0_i32 = arith.constant 0 : i32
    %c0_i32_0 = arith.constant 0 : i32
    %c0_i32_1 = arith.constant 0 : i32
    return %c0_i32, %c0_i32_0 : i32, i32
  }
  func.func @transform_3(%arg0: i32) -> (i32, i32) {
    %c0_i32 = arith.constant 0 : i32
    %c0_i32_0 = arith.constant 0 : i32
    %c0_i32_1 = arith.constant 0 : i32
    return %c0_i32, %c0_i32_0 : i32, i32
  }
  func.func @transform_4(%arg0: i32) -> (i32, i32) {
    %c0_i32 = arith.constant 0 : i32
    %c0_i32_0 = arith.constant 0 : i32
    %c0_i32_1 = arith.constant 0 : i32
    return %c0_i32, %c0_i32_0 : i32, i32
  }
  func.func @transform_5(%arg0: i32) -> (i32, i32) {
    %c0_i32 = arith.constant 0 : i32
    %c0_i32_0 = arith.constant 0 : i32
    %c0_i32_1 = arith.constant 0 : i32
    return %c0_i32, %c0_i32_0 : i32, i32
  }
  func.func @transform_6(%arg0: i32) -> (i32, i32) {
    %c0_i32 = arith.constant 0 : i32
    %c0_i32_0 = arith.constant 0 : i32
    %c0_i32_1 = arith.constant 0 : i32
    return %c0_i32, %c0_i32_0 : i32, i32
  }
  func.func @transform_7(%arg0: i32) -> (i32, i32) {
    %c0_i32 = arith.constant 0 : i32
    %c0_i32_0 = arith.constant 0 : i32
    return %arg0, %c0_i32 : i32, i32
  }
}

</mosaic_0001>

<llo_original>
// kernel: state_action_agent_forward.1
$region0: #{state_action_agent_forward.1}
  #allocation0 [shape = 'u32[]', space=smem, size = 0x4, offset = 0x4, fixed_abs, tag = 'smem constant byte address 0x4 - core index']
  #allocation1 [shape = 'u32[144,128]{1,0:T(1,128)}', space=vmem, size = 0x12000, scoped, tag = 'internal scratch']
  %s0 = inlined_call_operand.vmem [shape: f32[8,32], index: 0, kind: input, shape index: {}]
  %s1 = inlined_call_operand.hbm [shape: bf16[32,64], index: 1, kind: input, shape index: {}]
  %s2 = inlined_call_operand.vmem [shape: f32[1,64], index: 2, kind: input, shape index: {}]
  %s3 = inlined_call_operand.vmem [shape: bf16[64,64], index: 3, kind: input, shape index: {}]
  %s4 = inlined_call_operand.hbm [shape: f32[1,64], index: 4, kind: input, shape index: {}]
  %s5 = inlined_call_operand.vmem [shape: bf16[64,8], index: 5, kind: input, shape index: {}]
  %s6 = inlined_call_operand.vmem [shape: f32[1,8], index: 6, kind: input, shape index: {}]
  %s7 = inlined_call_operand.hbm [shape: f32[8,8], index: 7, kind: output, shape index: {}]
  %s8 = sld [smem:[#allocation0]]
  $region46: #{state_action_agent_forward.1} parent=0
    _
  %s10 = ssub.s32 1, %s8
  %s11 = scalar_select 0, %s10, %s8
  $region1: #{state_action_agent_forward.1} parent=0
    #allocation2 [shape = 'u8[8192]{0}', space=vmem, size = 0x2000, scoped, tag = 'input window, operand 1, single buffered']
    #allocation3 [shape = 's32[1]{0}', space=sflag, size = 0x4, scoped, tag = 'scoped memory for state_action_agent_forward.1']
    #allocation4 [shape = 's32[1]{0}', space=sflag, size = 0x4, scoped, tag = 'scoped memory for state_action_agent_forward.1']
    #allocation5 [shape = 'u8[512]{0}', space=vmem, size = 0x400, scoped, tag = 'input window, operand 4, single buffered']
    #allocation6 [shape = 's32[1]{0}', space=sflag, size = 0x4, scoped, tag = 'scoped memory for state_action_agent_forward.1']
    #allocation7 [shape = 'u8[4096]{0}', space=vmem, size = 0x1000, scoped, tag = 'output window, operand 0, single buffered']
    %12 = vsyncpa [#allocation3], 0
    %13 = vsyncpa [#allocation6], 0
    %14 = vsyncpa [#allocation4], 0
    // Predicated region
    $region2: #{state_action_agent_forward.1} parent=1 // pred_check
      _
    $region3: #{state_action_agent_forward.1} parent=1 // pred_check_branch
      %16 = sbr.rel (0) target = $region5
    $region4: #{state_action_agent_forward.1} parent=1 // pred_region
      _
    $region5: #{state_action_agent_forward.1} parent=1 // pred_fallthru
      _
    // Predicated region
    $region6: #{state_action_agent_forward.1} parent=1 // pred_check
      _
    $region7: #{state_action_agent_forward.1} parent=1 // pred_check_branch
      %18 = sbr.rel (0) target = $region9
    $region8: #{state_action_agent_forward.1} parent=1 // pred_region
      %s20 = ssub.s32 256, 256
      %21 = vsyncadd [#allocation3], %s20
      %s22 = sshll.u32 [#allocation2], 4
      %s23 = int_to_ptr.vmem [resolvable:$true] %s22
      %28 = dma.hbm_to_vmem [thread:$0]  %s1, 256, %s23, [#allocation3], 64, 64, 4
    $region9: #{state_action_agent_forward.1} parent=1 // pred_fallthru
      _
    // Predicated region
    $region10: #{state_action_agent_forward.1} parent=1 // pred_check
      _
    $region11: #{state_action_agent_forward.1} parent=1 // pred_check_branch
      %30 = sbr.rel (0) target = $region13
    $region12: #{state_action_agent_forward.1} parent=1 // pred_region
      _
    $region13: #{state_action_agent_forward.1} parent=1 // pred_fallthru
      _
    // Predicated region
    $region14: #{state_action_agent_forward.1} parent=1 // pred_check
      _
    $region15: #{state_action_agent_forward.1} parent=1 // pred_check_branch
      %32 = sbr.rel (0) target = $region17
    $region16: #{state_action_agent_forward.1} parent=1 // pred_region
      _
    $region17: #{state_action_agent_forward.1} parent=1 // pred_fallthru
      _
    // Predicated region
    $region18: #{state_action_agent_forward.1} parent=1 // pred_check
      _
    $region19: #{state_action_agent_forward.1} parent=1 // pred_check_branch
      %34 = sbr.rel (0) target = $region21
    $region20: #{state_action_agent_forward.1} parent=1 // pred_region
      %s36 = ssub.s32 16, 16
      %37 = vsyncadd [#allocation6], %s36
      %s39 = sshll.u32 [#allocation5], 4
      %s40 = int_to_ptr.vmem [resolvable:$true] %s39
      %42 = dma.hbm_to_vmem [thread:$0]  %s4, 16, %s40, [#allocation6]
    $region21: #{state_action_agent_forward.1} parent=1 // pred_fallthru
      _
    // Predicated region
    $region22: #{state_action_agent_forward.1} parent=1 // pred_check
      _
    $region23: #{state_action_agent_forward.1} parent=1 // pred_check_branch
      %44 = sbr.rel (0) target = $region25
    $region24: #{state_action_agent_forward.1} parent=1 // pred_region
      _
    $region25: #{state_action_agent_forward.1} parent=1 // pred_fallthru
      _
    // Predicated region
    $region26: #{state_action_agent_forward.1} parent=1 // pred_check
      _
    $region27: #{state_action_agent_forward.1} parent=1 // pred_check_branch
      %46 = sbr.rel (0) target = $region29
    $region28: #{state_action_agent_forward.1} parent=1 // pred_region
      _
    $region29: #{state_action_agent_forward.1} parent=1 // pred_fallthru
      _
    // Predicated region
    $region30: #{state_action_agent_forward.1} parent=1 // pred_check
      _
    $region31: #{state_action_agent_forward.1} parent=1 // pred_check_branch
      %48 = sbr.rel (0) target = $region33
    $region32: #{state_action_agent_forward.1} parent=1 // pred_region
      %49 = dma.done [#allocation3], 256
    $region33: #{state_action_agent_forward.1} parent=1 // pred_fallthru
      _
    // Predicated region
    $region34: #{state_action_agent_forward.1} parent=1 // pred_check
      _
    $region35: #{state_action_agent_forward.1} parent=1 // pred_check_branch
      %51 = sbr.rel (0) target = $region37
    $region36: #{state_action_agent_forward.1} parent=1 // pred_region
      %52 = dma.done [#allocation6], 16
    $region37: #{state_action_agent_forward.1} parent=1 // pred_fallthru
      _
    %v54 = vld [vmem:[%s0] sm:$0xff]
    %v55 = vpack.c.bf16 %v54, %v54
    %v56 = vld [vmem:[#allocation2] sm:$0xf]
    %v57 = vld [vmem:[#allocation2 + $0x4] sm:$0xf]
    %v58 = vld [vmem:[#allocation2 + $0x8] sm:$0xf]
    %v59 = vld [vmem:[#allocation2 + $0xc] sm:$0xf]
    %v60 = vld [vmem:[%s2] sm:$0x1]
    %v62 = vlaneseq
    %v63 = vshrl.u32 %v62, 7
    %v64 = vsub.s32 0, %v63
    %v65 = vrot.slane %v60, %v64
    %v71 = vunpack.c.l.b16 %v56
    %v72 = vunpack.c.l.b16 %v57
    %v73 = vunpack.c.l.b16 %v58
    %v74 = vunpack.c.l.b16 %v59
    %v75 = vpack.c.b16 %v72, %v71
    %v76 = vpack.c.b16 %v74, %v73
    %vm79 = vcmask 261120
    %v81 = vsel %vm79, %v55, 0
    %83 = vmatprep.subr.bf16.mxu0 0
    %84 = vmatpush1.bf16.msra.mxu0 0
    %85 = vmatprep.subr.bf16.mxu0 0
    %86 = vmatpush1.bf16.msra.mxu0 0
    %87 = vmatprep.subr.bf16.mxu0 0
    %88 = vmatpush1.bf16.msra.mxu0 0
    %89 = vmatprep.subr.bf16.mxu0 0
    %90 = vmatpush1.bf16.msra.mxu0 0
    %91 = vmatprep.subr.bf16.mxu0 0
    %92 = vmatpush1.bf16.msra.mxu0 0
    %93 = vmatprep.subr.bf16.mxu0 0
    %94 = vmatpush1.bf16.msra.mxu0 0
    %95 = vmatprep.subr.bf16.mxu0 0
    %96 = vmatpush1.bf16.msra.mxu0 %v76
    %97 = vmatprep.subr.bf16.mxu0 0
    %98 = vmatpush1.bf16.msra.mxu0 %v75
    %99 = vmatprep.subr.bf16.mxu0 0
    %100 = vmatpush2.bf16.msra.mxu0 0
    %101 = vmatprep.subr.bf16.mxu0 0
    %102 = vmatpush2.bf16.msra.mxu0 0
    %103 = vmatprep.subr.bf16.mxu0 0
    %104 = vmatpush2.bf16.msra.mxu0 0
    %105 = vmatprep.subr.bf16.mxu0 0
    %106 = vmatpush2.bf16.msra.mxu0 0
    %107 = vmatprep.subr.bf16.mxu0 0
    %108 = vmatpush2.bf16.msra.mxu0 0
    %109 = vmatprep.subr.bf16.mxu0 0
    %110 = vmatpush2.bf16.msra.mxu0 0
    %111 = vmatprep.subr.bf16.mxu0 0
    %112 = vmatpush2.bf16.msra.mxu0 0
    %113 = vmatprep.subr.bf16.mxu0 0
    %114 = vmatpush2.bf16.msra.mxu0 0
    %115 = vmatprep.mubr.bf16.mxu0 0
    %116 = vmatmul.mubr.bf16.gmra.mxu0 %v81
    %v117 = vpop.f32.mrf.mxu0
    %v118 = vadd.f32 %v65, %v117
    %v119 = vpop.f32.mrf.mxu0
    %v120 = vpop.f32.mrf.mxu0
    %v121 = vpop.f32.mrf.mxu0
    %122 = vdwg.mxu0
    %v123 = vmax.f32 %v118, 0.0
    %v124 = vpack.c.bf16 %v123, %v123
    %v125 = vld [vmem:[%s3] sm:$0xf]
    %v126 = vld [vmem:[%s3 + $0x4] sm:$0xf]
    %v127 = vld [vmem:[%s3 + $0x8] sm:$0xf]
    %v128 = vld [vmem:[%s3 + $0xc] sm:$0xf]
    %v129 = vld [vmem:[%s3 + $0x10] sm:$0xf]
    %v130 = vld [vmem:[%s3 + $0x14] sm:$0xf]
    %v131 = vld [vmem:[%s3 + $0x18] sm:$0xf]
    %v132 = vld [vmem:[%s3 + $0x1c] sm:$0xf]
    %v133 = vld [vmem:[#allocation5] sm:$0x1]
    %v135 = vlaneseq
    %v136 = vshrl.u32 %v135, 7
    %v137 = vsub.s32 0, %v136
    %v138 = vrot.slane %v133, %v137
    %v148 = vunpack.c.l.b16 %v125
    %v149 = vunpack.c.l.b16 %v126
    %v150 = vunpack.c.l.b16 %v127
    %v151 = vunpack.c.l.b16 %v128
    %v152 = vunpack.c.l.b16 %v129
    %v153 = vunpack.c.l.b16 %v130
    %v154 = vunpack.c.l.b16 %v131
    %v155 = vunpack.c.l.b16 %v132
    %v156 = vpack.c.b16 %v149, %v148
    %v157 = vpack.c.b16 %v151, %v150
    %v158 = vpack.c.b16 %v153, %v152
    %v159 = vpack.c.b16 %v155, %v154
    %vm164 = vcmask 523264
    %v166 = vsel %vm164, %v124, 0
    %168 = vmatprep.subr.bf16.mxu0 0
    %169 = vmatpush1.bf16.msra.mxu0 0
    %170 = vmatprep.subr.bf16.mxu0 0
    %171 = vmatpush1.bf16.msra.mxu0 0
    %172 = vmatprep.subr.bf16.mxu0 0
    %173 = vmatpush1.bf16.msra.mxu0 0
    %174 = vmatprep.subr.bf16.mxu0 0
    %175 = vmatpush1.bf16.msra.mxu0 0
    %176 = vmatprep.subr.bf16.mxu0 0
    %177 = vmatpush1.bf16.msra.mxu0 %v159
    %178 = vmatprep.subr.bf16.mxu0 0
    %179 = vmatpush1.bf16.msra.mxu0 %v158
    %180 = vmatprep.subr.bf16.mxu0 0
    %181 = vmatpush1.bf16.msra.mxu0 %v157
    %182 = vmatprep.subr.bf16.mxu0 0
    %183 = vmatpush1.bf16.msra.mxu0 %v156
    %184 = vmatprep.subr.bf16.mxu0 0
    %185 = vmatpush2.bf16.msra.mxu0 0
    %186 = vmatprep.subr.bf16.mxu0 0
    %187 = vmatpush2.bf16.msra.mxu0 0
    %188 = vmatprep.subr.bf16.mxu0 0
    %189 = vmatpush2.bf16.msra.mxu0 0
    %190 = vmatprep.subr.bf16.mxu0 0
    %191 = vmatpush2.bf16.msra.mxu0 0
    %192 = vmatprep.subr.bf16.mxu0 0
    %193 = vmatpush2.bf16.msra.mxu0 0
    %194 = vmatprep.subr.bf16.mxu0 0
    %195 = vmatpush2.bf16.msra.mxu0 0
    %196 = vmatprep.subr.bf16.mxu0 0
    %197 = vmatpush2.bf16.msra.mxu0 0
    %198 = vmatprep.subr.bf16.mxu0 0
    %199 = vmatpush2.bf16.msra.mxu0 0
    %200 = vmatprep.mubr.bf16.mxu0 0
    %201 = vmatmul.mubr.bf16.gmra.mxu0 %v166
    %v202 = vpop.f32.mrf.mxu0
    %v203 = vadd.f32 %v138, %v202
    %v204 = vpop.f32.mrf.mxu0
    %v205 = vpop.f32.mrf.mxu0
    %v206 = vpop.f32.mrf.mxu0
    %207 = vdwg.mxu0
    %v208 = vmax.f32 %v203, 0.0
    %v209 = vpack.c.bf16 %v208, %v208
    %v210 = vld [vmem:[%s5] sm:$0xf]
    %v211 = vld [vmem:[%s5 + $0x4] sm:$0xf]
    %v212 = vld [vmem:[%s5 + $0x8] sm:$0xf]
    %v213 = vld [vmem:[%s5 + $0xc] sm:$0xf]
    %v214 = vld [vmem:[%s5 + $0x10] sm:$0xf]
    %v215 = vld [vmem:[%s5 + $0x14] sm:$0xf]
    %v216 = vld [vmem:[%s5 + $0x18] sm:$0xf]
    %v217 = vld [vmem:[%s5 + $0x1c] sm:$0xf]
    %v218 = vld [vmem:[%s6] sm:$0x1]
    %v220 = vlaneseq
    %v221 = vshrl.u32 %v220, 7
    %v222 = vsub.s32 0, %v221
    %v223 = vrot.slane %v218, %v222
    %v233 = vunpack.c.l.b16 %v210
    %v234 = vunpack.c.l.b16 %v211
    %v235 = vunpack.c.l.b16 %v212
    %v236 = vunpack.c.l.b16 %v213
    %v237 = vunpack.c.l.b16 %v214
    %v238 = vunpack.c.l.b16 %v215
    %v239 = vunpack.c.l.b16 %v216
    %v240 = vunpack.c.l.b16 %v217
    %v241 = vpack.c.b16 %v234, %v233
    %v242 = vpack.c.b16 %v236, %v235
    %v243 = vpack.c.b16 %v238, %v237
    %v244 = vpack.c.b16 %v240, %v239
    %v250 = vsel %vm164, %v209, 0
    %252 = vmatprep.subr.bf16.mxu0 0
    %253 = vmatpush1.bf16.msra.mxu0 0
    %254 = vmatprep.subr.bf16.mxu0 0
    %255 = vmatpush1.bf16.msra.mxu0 0
    %256 = vmatprep.subr.bf16.mxu0 0
    %257 = vmatpush1.bf16.msra.mxu0 0
    %258 = vmatprep.subr.bf16.mxu0 0
    %259 = vmatpush1.bf16.msra.mxu0 0
    %260 = vmatprep.subr.bf16.mxu0 0
    %261 = vmatpush1.bf16.msra.mxu0 %v244
    %262 = vmatprep.subr.bf16.mxu0 0
    %263 = vmatpush1.bf16.msra.mxu0 %v243
    %264 = vmatprep.subr.bf16.mxu0 0
    %265 = vmatpush1.bf16.msra.mxu0 %v242
    %266 = vmatprep.subr.bf16.mxu0 0
    %267 = vmatpush1.bf16.msra.mxu0 %v241
    %268 = vmatprep.subr.bf16.mxu0 0
    %269 = vmatpush2.bf16.msra.mxu0 0
    %270 = vmatprep.subr.bf16.mxu0 0
    %271 = vmatpush2.bf16.msra.mxu0 0
    %272 = vmatprep.subr.bf16.mxu0 0
    %273 = vmatpush2.bf16.msra.mxu0 0
    %274 = vmatprep.subr.bf16.mxu0 0
    %275 = vmatpush2.bf16.msra.mxu0 0
    %276 = vmatprep.subr.bf16.mxu0 0
    %277 = vmatpush2.bf16.msra.mxu0 0
    %278 = vmatprep.subr.bf16.mxu0 0
    %279 = vmatpush2.bf16.msra.mxu0 0
    %280 = vmatprep.subr.bf16.mxu0 0
    %281 = vmatpush2.bf16.msra.mxu0 0
    %282 = vmatprep.subr.bf16.mxu0 0
    %283 = vmatpush2.bf16.msra.mxu0 0
    %284 = vmatprep.mubr.bf16.mxu0 0
    %285 = vmatmul.mubr.bf16.gmra.mxu0 %v250
    %v286 = vpop.f32.mrf.mxu0
    %v287 = vadd.f32 %v223, %v286
    %v288 = vpop.f32.mrf.mxu0
    %v289 = vpop.f32.mrf.mxu0
    %v290 = vpop.f32.mrf.mxu0
    %291 = vdwg.mxu0
    %vm292 = vcmask 64512
    %293 = vst.msk [vmem:[#allocation7] sm:$0xff] %vm292, %v287
    // Predicated region
    $region38: #{state_action_agent_forward.1} parent=1 // pred_check
      _
    $region39: #{state_action_agent_forward.1} parent=1 // pred_check_branch
      %295 = sbr.rel (0) target = $region41
    $region40: #{state_action_agent_forward.1} parent=1 // pred_region
      %s297 = ssub.s32 128, 128
      %298 = vsyncadd [#allocation4], %s297
      %s300 = sshll.u32 [#allocation7], 4
      %s301 = int_to_ptr.vmem [resolvable:$true] %s300
      %303 = dma.vmem_to_hbm [thread:$0]  %s301, 128, %s7, [#allocation4]
    $region41: #{state_action_agent_forward.1} parent=1 // pred_fallthru
      _
    // Predicated region
    $region42: #{state_action_agent_forward.1} parent=1 // pred_check
      _
    $region43: #{state_action_agent_forward.1} parent=1 // pred_check_branch
      %305 = sbr.rel (0) target = $region45
    $region44: #{state_action_agent_forward.1} parent=1 // pred_region
      %306 = dma.done [#allocation4], 128
    $region45: #{state_action_agent_forward.1} parent=1 // pred_fallthru
      _
    %307 = vsyncpa [#allocation3], 1
    %308 = vsyncpa [#allocation6], 1
    %309 = vsyncpa [#allocation4], 1

// kernel: state_action_agent_forward.1
$region0: #{state_action_agent_forward.1}
  #allocation0 [shape = 'u32[]', space=smem, size = 0x4, offset = 0x4, fixed_abs, tag = 'smem constant byte address 0x4 - core index']
  #allocation1 [shape = 'u32[144,128]{1,0:T(1,128)}', space=vmem, size = 0x12000, scoped, tag = 'internal scratch']
  %s0 = inlined_call_operand.vmem [shape: f32[8,32], index: 0, kind: input, shape index: {}]
  %s1 = inlined_call_operand.hbm [shape: bf16[32,64], index: 1, kind: input, shape index: {}]
  %s2 = inlined_call_operand.vmem [shape: f32[1,64], index: 2, kind: input, shape index: {}]
  %s3 = inlined_call_operand.vmem [shape: bf16[64,64], index: 3, kind: input, shape index: {}]
  %s4 = inlined_call_operand.hbm [shape: f32[1,64], index: 4, kind: input, shape index: {}]
  %s5 = inlined_call_operand.vmem [shape: bf16[64,8], index: 5, kind: input, shape index: {}]
  %s6 = inlined_call_operand.vmem [shape: f32[1,8], index: 6, kind: input, shape index: {}]
  %s7 = inlined_call_operand.hbm [shape: f32[8,8], index: 7, kind: output, shape index: {}]
  %s8 = sld [smem:[#allocation0]]
  $region46: #{state_action_agent_forward.1} parent=0
    _
  %s10 = ssub.s32 1, %s8
  %s11 = scalar_select 0, %s10, %s8
  $region1: #{state_action_agent_forward.1} parent=0
    #allocation2 [shape = 'u8[8192]{0}', space=vmem, size = 0x2000, scoped, tag = 'input window, operand 1, single buffered']
    #allocation3 [shape = 's32[1]{0}', space=sflag, size = 0x4, scoped, tag = 'scoped memory for state_action_agent_forward.1']
    #allocation4 [shape = 's32[1]{0}', space=sflag, size = 0x4, scoped, tag = 'scoped memory for state_action_agent_forward.1']
    #allocation5 [shape = 'u8[512]{0}', space=vmem, size = 0x400, scoped, tag = 'input window, operand 4, single buffered']
    #allocation6 [shape = 's32[1]{0}', space=sflag, size = 0x4, scoped, tag = 'scoped memory for state_action_agent_forward.1']
    #allocation7 [shape = 'u8[4096]{0}', space=vmem, size = 0x1000, scoped, tag = 'output window, operand 0, single buffered']
    %12 = vsyncpa [#allocation3], 0
    %13 = vsyncpa [#allocation6], 0
    %14 = vsyncpa [#allocation4], 0
    // Predicated region
    $region2: #{state_action_agent_forward.1} parent=1 // pred_check
      _
    $region3: #{state_action_agent_forward.1} parent=1 // pred_check_branch
      %16 = sbr.rel (0) target = $region5
    $region4: #{state_action_agent_forward.1} parent=1 // pred_region
      _
    $region5: #{state_action_agent_forward.1} parent=1 // pred_fallthru
      _
    // Predicated region
    $region6: #{state_action_agent_forward.1} parent=1 // pred_check
      _
    $region7: #{state_action_agent_forward.1} parent=1 // pred_check_branch
      %18 = sbr.rel (0) target = $region9
    $region8: #{state_action_agent_forward.1} parent=1 // pred_region
      %s20 = ssub.s32 256, 256
      %21 = vsyncadd [#allocation3], %s20
      %s22 = sshll.u32 [#allocation2], 4
      %s23 = int_to_ptr.vmem [resolvable:$true] %s22
      %28 = dma.hbm_to_vmem [thread:$0]  %s1, 256, %s23, [#allocation3], 64, 64, 4
    $region9: #{state_action_agent_forward.1} parent=1 // pred_fallthru
      _
    // Predicated region
    $region10: #{state_action_agent_forward.1} parent=1 // pred_check
      _
    $region11: #{state_action_agent_forward.1} parent=1 // pred_check_branch
      %30 = sbr.rel (0) target = $region13
    $region12: #{state_action_agent_forward.1} parent=1 // pred_region
      _
    $region13: #{state_action_agent_forward.1} parent=1 // pred_fallthru
      _
    // Predicated region
    $region14: #{state_action_agent_forward.1} parent=1 // pred_check
      _
    $region15: #{state_action_agent_forward.1} parent=1 // pred_check_branch
      %32 = sbr.rel (0) target = $region17
    $region16: #{state_action_agent_forward.1} parent=1 // pred_region
      _
    $region17: #{state_action_agent_forward.1} parent=1 // pred_fallthru
      _
    // Predicated region
    $region18: #{state_action_agent_forward.1} parent=1 // pred_check
      _
    $region19: #{state_action_agent_forward.1} parent=1 // pred_check_branch
      %34 = sbr.rel (0) target = $region21
    $region20: #{state_action_agent_forward.1} parent=1 // pred_region
      %s36 = ssub.s32 16, 16
      %37 = vsyncadd [#allocation6], %s36
      %s39 = sshll.u32 [#allocation5], 4
      %s40 = int_to_ptr.vmem [resolvable:$true] %s39
      %42 = dma.hbm_to_vmem [thread:$0]  %s4, 16, %s40, [#allocation6]
    $region21: #{state_action_agent_forward.1} parent=1 // pred_fallthru
      _
    // Predicated region
    $region22: #{state_action_agent_forward.1} parent=1 // pred_check
      _
    $region23: #{state_action_agent_forward.1} parent=1 // pred_check_branch
      %44 = sbr.rel (0) target = $region25
    $region24: #{state_action_agent_forward.1} parent=1 // pred_region
      _
    $region25: #{state_action_agent_forward.1} parent=1 // pred_fallthru
      _
    // Predicated region
    $region26: #{state_action_agent_forward.1} parent=1 // pred_check
      _
    $region27: #{state_action_agent_forward.1} parent=1 // pred_check_branch
      %46 = sbr.rel (0) target = $region29
    $region28: #{state_action_agent_forward.1} parent=1 // pred_region
      _
    $region29: #{state_action_agent_forward.1} parent=1 // pred_fallthru
      _
    // Predicated region
    $region30: #{state_action_agent_forward.1} parent=1 // pred_check
      _
    $region31: #{state_action_agent_forward.1} parent=1 // pred_check_branch
      %48 = sbr.rel (0) target = $region33
    $region32: #{state_action_agent_forward.1} parent=1 // pred_region
      %49 = dma.done [#allocation3], 256
    $region33: #{state_action_agent_forward.1} parent=1 // pred_fallthru
      _
    // Predicated region
    $region34: #{state_action_agent_forward.1} parent=1 // pred_check
      _
    $region35: #{state_action_agent_forward.1} parent=1 // pred_check_branch
      %51 = sbr.rel (0) target = $region37
    $region36: #{state_action_agent_forward.1} parent=1 // pred_region
      %52 = dma.done [#allocation6], 16
    $region37: #{state_action_agent_forward.1} parent=1 // pred_fallthru
      _
    %v54 = vld [vmem:[%s0] sm:$0xff]
    %v55 = vpack.c.bf16 %v54, %v54
    %v56 = vld [vmem:[#allocation2] sm:$0xf]
    %v57 = vld [vmem:[#allocation2 + $0x4] sm:$0xf]
    %v58 = vld [vmem:[#allocation2 + $0x8] sm:$0xf]
    %v59 = vld [vmem:[#allocation2 + $0xc] sm:$0xf]
    %v60 = vld [vmem:[%s2] sm:$0x1]
    %v62 = vlaneseq
    %v63 = vshrl.u32 %v62, 7
    %v64 = vsub.s32 0, %v63
    %v65 = vrot.slane %v60, %v64
    %v71 = vunpack.c.l.b16 %v56
    %v72 = vunpack.c.l.b16 %v57
    %v73 = vunpack.c.l.b16 %v58
    %v74 = vunpack.c.l.b16 %v59
    %v75 = vpack.c.b16 %v72, %v71
    %v76 = vpack.c.b16 %v74, %v73
    %vm79 = vcmask 261120
    %v81 = vsel %vm79, %v55, 0
    %83 = vmatprep.subr.bf16.mxu0 0
    %84 = vmatpush1.bf16.msra.mxu0 0
    %85 = vmatprep.subr.bf16.mxu0 0
    %86 = vmatpush1.bf16.msra.mxu0 0
    %87 = vmatprep.subr.bf16.mxu0 0
    %88 = vmatpush1.bf16.msra.mxu0 0
    %89 = vmatprep.subr.bf16.mxu0 0
    %90 = vmatpush1.bf16.msra.mxu0 0
    %91 = vmatprep.subr.bf16.mxu0 0
    %92 = vmatpush1.bf16.msra.mxu0 0
    %93 = vmatprep.subr.bf16.mxu0 0
    %94 = vmatpush1.bf16.msra.mxu0 0
    %95 = vmatprep.subr.bf16.mxu0 0
    %96 = vmatpush1.bf16.msra.mxu0 %v76
    %97 = vmatprep.subr.bf16.mxu0 0
    %98 = vmatpush1.bf16.msra.mxu0 %v75
    %99 = vmatprep.subr.bf16.mxu0 0
    %100 = vmatpush2.bf16.msra.mxu0 0
    %101 = vmatprep.subr.bf16.mxu0 0
    %102 = vmatpush2.bf16.msra.mxu0 0
    %103 = vmatprep.subr.bf16.mxu0 0
    %104 = vmatpush2.bf16.msra.mxu0 0
    %105 = vmatprep.subr.bf16.mxu0 0
    %106 = vmatpush2.bf16.msra.mxu0 0
    %107 = vmatprep.subr.bf16.mxu0 0
    %108 = vmatpush2.bf16.msra.mxu0 0
    %109 = vmatprep.subr.bf16.mxu0 0
    %110 = vmatpush2.bf16.msra.mxu0 0
    %111 = vmatprep.subr.bf16.mxu0 0
    %112 = vmatpush2.bf16.msra.mxu0 0
    %113 = vmatprep.subr.bf16.mxu0 0
    %114 = vmatpush2.bf16.msra.mxu0 0
    %115 = vmatprep.mubr.bf16.mxu0 0
    %116 = vmatmul.mubr.bf16.gmra.mxu0 %v81
    %v117 = vpop.f32.mrf.mxu0
    %v118 = vadd.f32 %v65, %v117
    %v119 = vpop.f32.mrf.mxu0
    %v120 = vpop.f32.mrf.mxu0
    %v121 = vpop.f32.mrf.mxu0
    %122 = vdwg.mxu0
    %v123 = vmax.f32 %v118, 0.0
    %v124 = vpack.c.bf16 %v123, %v123
    %v125 = vld [vmem:[%s3] sm:$0xf]
    %v126 = vld [vmem:[%s3 + $0x4] sm:$0xf]
    %v127 = vld [vmem:[%s3 + $0x8] sm:$0xf]
    %v128 = vld [vmem:[%s3 + $0xc] sm:$0xf]
    %v129 = vld [vmem:[%s3 + $0x10] sm:$0xf]
    %v130 = vld [vmem:[%s3 + $0x14] sm:$0xf]
    %v131 = vld [vmem:[%s3 + $0x18] sm:$0xf]
    %v132 = vld [vmem:[%s3 + $0x1c] sm:$0xf]
    %v133 = vld [vmem:[#allocation5] sm:$0x1]
    %v135 = vlaneseq
    %v136 = vshrl.u32 %v135, 7
    %v137 = vsub.s32 0, %v136
    %v138 = vrot.slane %v133, %v137
    %v148 = vunpack.c.l.b16 %v125
    %v149 = vunpack.c.l.b16 %v126
    %v150 = vunpack.c.l.b16 %v127
    %v151 = vunpack.c.l.b16 %v128
    %v152 = vunpack.c.l.b16 %v129
    %v153 = vunpack.c.l.b16 %v130
    %v154 = vunpack.c.l.b16 %v131
    %v155 = vunpack.c.l.b16 %v132
    %v156 = vpack.c.b16 %v149, %v148
    %v157 = vpack.c.b16 %v151, %v150
    %v158 = vpack.c.b16 %v153, %v152
    %v159 = vpack.c.b16 %v155, %v154
    %vm164 = vcmask 523264
    %v166 = vsel %vm164, %v124, 0
    %168 = vmatprep.subr.bf16.mxu0 0
    %169 = vmatpush1.bf16.msra.mxu0 0
    %170 = vmatprep.subr.bf16.mxu0 0
    %171 = vmatpush1.bf16.msra.mxu0 0
    %172 = vmatprep.subr.bf16.mxu0 0
    %173 = vmatpush1.bf16.msra.mxu0 0
    %174 = vmatprep.subr.bf16.mxu0 0
    %175 = vmatpush1.bf16.msra.mxu0 0
    %176 = vmatprep.subr.bf16.mxu0 0
    %177 = vmatpush1.bf16.msra.mxu0 %v159
    %178 = vmatprep.subr.bf16.mxu0 0
    %179 = vmatpush1.bf16.msra.mxu0 %v158
    %180 = vmatprep.subr.bf16.mxu0 0
    %181 = vmatpush1.bf16.msra.mxu0 %v157
    %182 = vmatprep.subr.bf16.mxu0 0
    %183 = vmatpush1.bf16.msra.mxu0 %v156
    %184 = vmatprep.subr.bf16.mxu0 0
    %185 = vmatpush2.bf16.msra.mxu0 0
    %186 = vmatprep.subr.bf16.mxu0 0
    %187 = vmatpush2.bf16.msra.mxu0 0
    %188 = vmatprep.subr.bf16.mxu0 0
    %189 = vmatpush2.bf16.msra.mxu0 0
    %190 = vmatprep.subr.bf16.mxu0 0
    %191 = vmatpush2.bf16.msra.mxu0 0
    %192 = vmatprep.subr.bf16.mxu0 0
    %193 = vmatpush2.bf16.msra.mxu0 0
    %194 = vmatprep.subr.bf16.mxu0 0
    %195 = vmatpush2.bf16.msra.mxu0 0
    %196 = vmatprep.subr.bf16.mxu0 0
    %197 = vmatpush2.bf16.msra.mxu0 0
    %198 = vmatprep.subr.bf16.mxu0 0
    %199 = vmatpush2.bf16.msra.mxu0 0
    %200 = vmatprep.mubr.bf16.mxu0 0
    %201 = vmatmul.mubr.bf16.gmra.mxu0 %v166
    %v202 = vpop.f32.mrf.mxu0
    %v203 = vadd.f32 %v138, %v202
    %v204 = vpop.f32.mrf.mxu0
    %v205 = vpop.f32.mrf.mxu0
    %v206 = vpop.f32.mrf.mxu0
    %207 = vdwg.mxu0
    %v208 = vmax.f32 %v203, 0.0
    %v209 = vpack.c.bf16 %v208, %v208
    %v210 = vld [vmem:[%s5] sm:$0xf]
    %v211 = vld [vmem:[%s5 + $0x4] sm:$0xf]
    %v212 = vld [vmem:[%s5 + $0x8] sm:$0xf]
    %v213 = vld [vmem:[%s5 + $0xc] sm:$0xf]
    %v214 = vld [vmem:[%s5 + $0x10] sm:$0xf]
    %v215 = vld [vmem:[%s5 + $0x14] sm:$0xf]
    %v216 = vld [vmem:[%s5 + $0x18] sm:$0xf]
    %v217 = vld [vmem:[%s5 + $0x1c] sm:$0xf]
    %v218 = vld [vmem:[%s6] sm:$0x1]
    %v220 = vlaneseq
    %v221 = vshrl.u32 %v220, 7
    %v222 = vsub.s32 0, %v221
    %v223 = vrot.slane %v218, %v222
    %v233 = vunpack.c.l.b16 %v210
    %v234 = vunpack.c.l.b16 %v211
    %v235 = vunpack.c.l.b16 %v212
    %v236 = vunpack.c.l.b16 %v213
    %v237 = vunpack.c.l.b16 %v214
    %v238 = vunpack.c.l.b16 %v215
    %v239 = vunpack.c.l.b16 %v216
    %v240 = vunpack.c.l.b16 %v217
    %v241 = vpack.c.b16 %v234, %v233
    %v242 = vpack.c.b16 %v236, %v235
    %v243 = vpack.c.b16 %v238, %v237
    %v244 = vpack.c.b16 %v240, %v239
    %v250 = vsel %vm164, %v209, 0
    %252 = vmatprep.subr.bf16.mxu0 0
    %253 = vmatpush1.bf16.msra.mxu0 0
    %254 = vmatprep.subr.bf16.mxu0 0
    %255 = vmatpush1.bf16.msra.mxu0 0
    %256 = vmatprep.subr.bf16.mxu0 0
    %257 = vmatpush1.bf16.msra.mxu0 0
    %258 = vmatprep.subr.bf16.mxu0 0
    %259 = vmatpush1.bf16.msra.mxu0 0
    %260 = vmatprep.subr.bf16.mxu0 0
    %261 = vmatpush1.bf16.msra.mxu0 %v244
    %262 = vmatprep.subr.bf16.mxu0 0
    %263 = vmatpush1.bf16.msra.mxu0 %v243
    %264 = vmatprep.subr.bf16.mxu0 0
    %265 = vmatpush1.bf16.msra.mxu0 %v242
    %266 = vmatprep.subr.bf16.mxu0 0
    %267 = vmatpush1.bf16.msra.mxu0 %v241
    %268 = vmatprep.subr.bf16.mxu0 0
    %269 = vmatpush2.bf16.msra.mxu0 0
    %270 = vmatprep.subr.bf16.mxu0 0
    %271 = vmatpush2.bf16.msra.mxu0 0
    %272 = vmatprep.subr.bf16.mxu0 0
    %273 = vmatpush2.bf16.msra.mxu0 0
    %274 = vmatprep.subr.bf16.mxu0 0
    %275 = vmatpush2.bf16.msra.mxu0 0
    %276 = vmatprep.subr.bf16.mxu0 0
    %277 = vmatpush2.bf16.msra.mxu0 0
    %278 = vmatprep.subr.bf16.mxu0 0
    %279 = vmatpush2.bf16.msra.mxu0 0
    %280 = vmatprep.subr.bf16.mxu0 0
    %281 = vmatpush2.bf16.msra.mxu0 0
    %282 = vmatprep.subr.bf16.mxu0 0
    %283 = vmatpush2.bf16.msra.mxu0 0
    %284 = vmatprep.mubr.bf16.mxu0 0
    %285 = vmatmul.mubr.bf16.gmra.mxu0 %v250
    %v286 = vpop.f32.mrf.mxu0
    %v287 = vadd.f32 %v223, %v286
    %v288 = vpop.f32.mrf.mxu0
    %v289 = vpop.f32.mrf.mxu0
    %v290 = vpop.f32.mrf.mxu0
    %291 = vdwg.mxu0
    %vm292 = vcmask 64512
    %293 = vst.msk [vmem:[#allocation7] sm:$0xff] %vm292, %v287
    // Predicated region
    $region38: #{state_action_agent_forward.1} parent=1 // pred_check
      _
    $region39: #{state_action_agent_forward.1} parent=1 // pred_check_branch
      %295 = sbr.rel (0) target = $region41
    $region40: #{state_action_agent_forward.1} parent=1 // pred_region
      %s297 = ssub.s32 128, 128
      %298 = vsyncadd [#allocation4], %s297
      %s300 = sshll.u32 [#allocation7], 4
      %s301 = int_to_ptr.vmem [resolvable:$true] %s300
      %303 = dma.vmem_to_hbm [thread:$0]  %s301, 128, %s7, [#allocation4]
    $region41: #{state_action_agent_forward.1} parent=1 // pred_fallthru
      _
    // Predicated region
    $region42: #{state_action_agent_forward.1} parent=1 // pred_check
      _
    $region43: #{state_action_agent_forward.1} parent=1 // pred_check_branch
      %305 = sbr.rel (0) target = $region45
    $region44: #{state_action_agent_forward.1} parent=1 // pred_region
      %306 = dma.done [#allocation4], 128
    $region45: #{state_action_agent_forward.1} parent=1 // pred_fallthru
      _
    %307 = vsyncpa [#allocation3], 1
    %308 = vsyncpa [#allocation6], 1
    %309 = vsyncpa [#allocation4], 1

</llo_original>
